<compile_context>
chip_gen: v6e
topology: v6e:2x2x1
jax: 0.10.0
libtpu: 0.0.40
codegen_flags: <defaults>
</compile_context>

<pallas_src>
import functools
import math

import jax
import jax.numpy as jnp
from jax.experimental import pallas as pl
from jax.experimental.pallas import tpu as pltpu


def _round_up(x, m):
    return ((x + m - 1) // m) * m


def _pad2(a, rows, cols, dtype):
    """Zero-pad a 2-D array to (rows, cols) in `dtype`; no-op if already there."""
    a = a.astype(dtype)
    if a.shape == (rows, cols):
        return a
    return jnp.zeros((rows, cols), dtype).at[: a.shape[0], : a.shape[1]].set(a)


def _choose_n_pad_and_tile(n):
    """Pick (n_pad, tile) for the adj @ support reduction.

    512-wide tiles reach ~85% of the HBM roofline (vs ~63% at 256), but
    rounding N up to the tile inflates the memory-bound adj stream, so only
    take the bigger tile when the extra padding costs <= ~15% more adj bytes.
    """
    n128 = _round_up(n, 128)
    for t in (512, 256, 128):
        nt = _round_up(n, t)
        if nt * nt <= 1.15 * n128 * n128:
            return nt, t
    return n128, 128


# --------------------- fused small-problem fast path ------------------------
def _fused_gcn_kernel(x_ref, w_ref, adj_ref, b_ref, o_ref):
    support = jnp.dot(x_ref[...], w_ref[...], preferred_element_type=jnp.float32)
    out = jnp.dot(adj_ref[...], support, preferred_element_type=jnp.float32)
    o_ref[...] = (out + b_ref[...]).astype(o_ref.dtype)


# --------------------- kernel 1: support = X @ W ----------------------------
def _support_kernel(x_ref, w_ref, o_ref, acc_ref):
    k = pl.program_id(1)

    @pl.when(k == 0)
    def _init():
        acc_ref[...] = jnp.zeros_like(acc_ref)

    acc_ref[...] += jnp.dot(
        x_ref[...], w_ref[...], preferred_element_type=jnp.float32
    )

    @pl.when(k == pl.num_programs(1) - 1)
    def _finalize():
        o_ref[...] = acc_ref[...].astype(o_ref.dtype)


# ------------ kernel 2: out = adj @ support + bias (streamed support) -------
def _adj_matmul_stream_kernel(adj_ref, sup_ref, b_ref, o_ref):
    k = pl.program_id(1)

    @pl.when(k == 0)
    def _init():
        o_ref[...] = jnp.zeros_like(o_ref)

    # Output block index is constant across k => o_ref is VMEM-resident;
    # accumulate directly (no scratch needed, output dtype is f32).
    o_ref[...] += jnp.dot(
        adj_ref[...], sup_ref[...], preferred_element_type=jnp.float32
    )

    @pl.when(k == pl.num_programs(1) - 1)
    def _finalize():
        o_ref[...] += b_ref[...]   # bias added exactly once


# -------- kernel 2 variant: support fully VMEM-resident across the grid -----
def _adj_matmul_resident_kernel(adj_ref, sup_ref, b_ref, o_ref, *, tk):
    k = pl.program_id(1)

    @pl.when(k == 0)
    def _init():
        o_ref[...] = jnp.zeros_like(o_ref)

    start = pl.multiple_of(k * tk, tk)
    o_ref[...] += jnp.dot(
        adj_ref[...], sup_ref[pl.ds(start, tk), :],
        preferred_element_type=jnp.float32,
    )

    @pl.when(k == pl.num_programs(1) - 1)
    def _finalize():
        o_ref[...] += b_ref[...]


def gcn_forward(x, adj, weight, bias, *, adj_dtype=jnp.bfloat16,
                support_dtype=None):
    """GraphConvolution forward: squeeze -> (adj @ (x @ W)) + b.

    x: (..., N, Fin), adj: (..., N, N) (size-1 dims squeezed, mirroring
    torch.squeeze), weight: (Fin, Fout), bias: (Fout,) or None.

    adj_dtype / support_dtype: HBM storage dtypes of the adjacency and the
    support intermediate on the tiled path (MXU accumulation stays f32).
    bf16 halves the dominant memory-bound adj traffic on v5e/v6e/v7x; pass
    jnp.float32 for exact-vs-f32 numerics.  The fused small-shape fast path
    always computes in f32.
    """
    x = jnp.squeeze(x)
    adj = jnp.squeeze(adj)
    assert x.ndim == 2 and adj.ndim == 2, (
        "expects 2-D node features / adjacency after squeeze (degenerate "
        "N==1 or Fin==1 inputs are unsupported, as in the torch module)")

    N, Fin = x.shape
    assert adj.shape == (N, N), "adjacency must be (N, N)"
    Fout = weight.shape[1]
    if support_dtype is None:
        support_dtype = adj_dtype
    if bias is None:
        bias = jnp.zeros((Fout,), jnp.float32)

    fin_pad = _round_up(Fin, 128)
    fout_pad = _round_up(Fout, 128)
    n128 = _round_up(N, 128)

    b_p = _pad2(bias.reshape(1, Fout), 1, fout_pad, jnp.float32)

    # ------------- fast path: whole problem fits a single tile --------------
    if n128 <= 512 and fin_pad <= 512 and fout_pad <= 512:
        n_pad = n128
        x_p = _pad2(x, n_pad, fin_pad, jnp.float32)
        w_p = _pad2(weight, fin_pad, fout_pad, jnp.float32)
        adj_p = _pad2(adj, n_pad, n_pad, jnp.float32)
        out_p = pl.pallas_call(
            _fused_gcn_kernel,
            out_shape=jax.ShapeDtypeStruct((n_pad, fout_pad), jnp.float32),
            grid_spec=pltpu.PrefetchScalarGridSpec(
                num_scalar_prefetch=0,
                grid=(1,),
                in_specs=[
                    pl.BlockSpec((n_pad, fin_pad), lambda i: (0, 0)),
                    pl.BlockSpec((fin_pad, fout_pad), lambda i: (0, 0)),
                    pl.BlockSpec((n_pad, n_pad), lambda i: (0, 0)),
                    pl.BlockSpec((1, fout_pad), lambda i: (0, 0)),
                ],
                out_specs=pl.BlockSpec((n_pad, fout_pad), lambda i: (0, 0)),
            ),
            compiler_params=pltpu.CompilerParams(
                dimension_semantics=("arbitrary",),
                vmem_limit_bytes=32 * 1024 * 1024,
            ),
            cost_estimate=pl.CostEstimate(
                flops=2 * n_pad * fout_pad * (fin_pad + n_pad),
                transcendentals=0,
                bytes_accessed=4 * (n_pad * fin_pad + fin_pad * fout_pad
                                    + n_pad * n_pad + fout_pad
                                    + n_pad * fout_pad),
            ),
        )(x_p, w_p, adj_p, b_p)
        return out_p[:N, :Fout]

    # ------------------------------ tiled path -------------------------------
    n_pad, tile = _choose_n_pad_and_tile(N)
    tk = tile   # reduction tile over N
    tm = tile   # output-row tile
    # Megacore-aware row tiling: keep >= 2 parallel row tiles so both v7x
    # TensorCores get work (harmless on single-TC v5e/v6e).
    while tm > 128 and n_pad // tm < 2:
        tm //= 2

    adj_itemsize = jnp.dtype(adj_dtype).itemsize
    sup_itemsize = jnp.dtype(support_dtype).itemsize

    x_p = _pad2(x, n_pad, fin_pad, jnp.float32)
    w_p = _pad2(weight, fin_pad, fout_pad, jnp.float32)
    # TODO(synk): for large graphs whose N is far from tile-aligned, mask the
    # tail tile in-kernel (broadcasted_iota mask) instead of materializing a
    # zero-padded copy of adj through HBM.
    adj_p = _pad2(adj, n_pad, n_pad, adj_dtype)

    # ------ support = X @ W  (computed once; Fin reduction is tiled) --------
    tkf = min(fin_pad, 512)
    support = pl.pallas_call(
        _support_kernel,
        out_shape=jax.ShapeDtypeStruct((n_pad, fout_pad), support_dtype),
        grid_spec=pltpu.PrefetchScalarGridSpec(
            num_scalar_prefetch=0,
            grid=(n_pad // tm, fin_pad // tkf),
            in_specs=[
                pl.BlockSpec((tm, tkf), lambda i, k: (i, k)),
                pl.BlockSpec((tkf, fout_pad), lambda i, k: (k, 0)),
            ],
            out_specs=pl.BlockSpec((tm, fout_pad), lambda i, k: (i, 0)),
            scratch_shapes=[pltpu.VMEM((tm, fout_pad), jnp.float32)],
        ),
        compiler_params=pltpu.CompilerParams(
            dimension_semantics=("parallel", "arbitrary"),
            vmem_limit_bytes=32 * 1024 * 1024,
        ),
        cost_estimate=pl.CostEstimate(
            flops=2 * n_pad * fin_pad * fout_pad,
            transcendentals=0,
            bytes_accessed=(4 * n_pad * fin_pad
                            + 4 * (n_pad // tm) * fin_pad * fout_pad
                            + sup_itemsize * n_pad * fout_pad),
        ),
    )(x_p, w_p)

    # ------ out = adj @ support + bias  (memory-bound on adj) ---------------
    resident = n_pad * fout_pad * sup_itemsize <= 4 * 1024 * 1024
    if resident:
        kernel2 = functools.partial(_adj_matmul_resident_kernel, tk=tk)
        sup_spec = pl.BlockSpec((n_pad, fout_pad), lambda i, k: (0, 0))
        sup_bytes = sup_itemsize * n_pad * fout_pad
    else:
        kernel2 = _adj_matmul_stream_kernel
        sup_spec = pl.BlockSpec((tk, fout_pad), lambda i, k: (k, 0))
        sup_bytes = sup_itemsize * (n_pad // tm) * n_pad * fout_pad

    out_p = pl.pallas_call(
        kernel2,
        out_shape=jax.ShapeDtypeStruct((n_pad, fout_pad), jnp.float32),
        grid_spec=pltpu.PrefetchScalarGridSpec(
            num_scalar_prefetch=0,
            grid=(n_pad // tm, n_pad // tk),
            in_specs=[
                pl.BlockSpec((tm, tk), lambda i, k: (i, k)),
                sup_spec,
                pl.BlockSpec((1, fout_pad), lambda i, k: (0, 0)),
            ],
            out_specs=pl.BlockSpec((tm, fout_pad), lambda i, k: (i, 0)),
        ),
        compiler_params=pltpu.CompilerParams(
            dimension_semantics=("parallel", "arbitrary"),
            vmem_limit_bytes=32 * 1024 * 1024,
        ),
        cost_estimate=pl.CostEstimate(
            flops=2 * n_pad * n_pad * fout_pad,
            transcendentals=0,
            bytes_accessed=(adj_itemsize * n_pad * n_pad + sup_bytes
                            + 4 * fout_pad + 4 * n_pad * fout_pad),
        ),
    )(adj_p, support, b_p)

    return out_p[:N, :Fout]


def _reference(x, adj, weight, bias):
    xs, adjs = jnp.squeeze(x), jnp.squeeze(adj)
    sup = jnp.dot(xs, weight, precision=jax.lax.Precision.HIGHEST)
    out = jnp.dot(adjs, sup, precision=jax.lax.Precision.HIGHEST)
    return out + bias


if __name__ == "__main__":
    key = jax.random.PRNGKey(0)
    k_x, k_adj, k_w, k_b, k_x2, k_adj2, k_w2, k_b2 = jax.random.split(key, 8)

    # ---- Test 1: toy module shapes (exercises the fused fast path) ---------
    N, Fin, Fout = 16, 32, 64
    stdv = 1.0 / math.sqrt(Fout)
    weight = jax.random.uniform(k_w, (Fin, Fout), minval=-stdv, maxval=stdv,
                                dtype=jnp.float32)
    bias = jax.random.uniform(k_b, (Fout,), minval=-stdv, maxval=stdv,
                              dtype=jnp.float32)
    x = jax.random.normal(k_x, (1, N, Fin), dtype=jnp.float32)
    adj = jax.random.uniform(k_adj, (1, N, N), dtype=jnp.float32)

    out = jax.block_until_ready(jax.jit(gcn_forward)(x, adj, weight, bias))
    ref = _reference(x, adj, weight, bias)
    assert out.shape == (N, Fout)
    assert jnp.allclose(out, ref, atol=2e-3, rtol=2e-3), "fast path mismatch"

    # ---- Test 2: larger graph (exercises the tiled path) -------------------
    N2, Fin2, Fout2 = 1000, 200, 64
    stdv2 = 1.0 / math.sqrt(Fout2)
    w2 = jax.random.uniform(k_w2, (Fin2, Fout2), minval=-stdv2, maxval=stdv2,
                            dtype=jnp.float32)
    b2 = jax.random.uniform(k_b2, (Fout2,), minval=-stdv2, maxval=stdv2,
                            dtype=jnp.float32)
    x2 = jax.random.normal(k_x2, (N2, Fin2), dtype=jnp.float32)
    adj2 = jax.random.uniform(k_adj2, (N2, N2), dtype=jnp.float32)
    ref2 = _reference(x2, adj2, w2, b2)

    # exact-numerics (f32) tiled path
    fwd_f32 = jax.jit(functools.partial(gcn_forward, adj_dtype=jnp.float32))
    out2 = jax.block_until_ready(fwd_f32(x2, adj2, w2, b2))
    assert out2.shape == (N2, Fout2)
    rel_f32 = jnp.linalg.norm(out2 - ref2) / jnp.linalg.norm(ref2)
    assert rel_f32 < 3e-3, f"tiled f32 path mismatch (rel={rel_f32})"

    # default (bf16 adj + support storage, f32 accumulation) tiled path
    out2_bf16 = jax.block_until_ready(jax.jit(gcn_forward)(x2, adj2, w2, b2))
    rel_bf16 = jnp.linalg.norm(out2_bf16 - ref2) / jnp.linalg.norm(ref2)
    assert rel_bf16 < 3e-2, f"tiled bf16 path mismatch (rel={rel_bf16})"

    print("KERNEL_OK")
</pallas_src>

<mosaic_0001>
module attributes {stable_mosaic.version = 11 : i64} {
  func.func @_fused_gcn_kernel(%arg0: i32, %arg1: memref<128x128xf32, #tpu.memory_space<vmem>>, %arg2: memref<128x128xf32, #tpu.memory_space<vmem>>, %arg3: memref<128x128xf32, #tpu.memory_space<vmem>>, %arg4: memref<1x128xf32, #tpu.memory_space<vmem>>, %arg5: memref<128x128xf32, #tpu.memory_space<vmem>>) attributes {dimension_semantics = [#tpu.dimension_semantics<arbitrary>], iteration_bounds = array<i64: 1>, scalar_prefetch = 0 : i64, scratch_operands = 0 : i64, tpu.core_type = #tpu.core_type<tc>, window_params = [{pipeline_mode = #tpu.pipeline_mode<synchronous>, transform_indices = @transform_0, window_bounds = array<i64: 128, 128>}, {pipeline_mode = #tpu.pipeline_mode<synchronous>, transform_indices = @transform_1, window_bounds = array<i64: 128, 128>}, {pipeline_mode = #tpu.pipeline_mode<synchronous>, transform_indices = @transform_2, window_bounds = array<i64: 128, 128>}, {pipeline_mode = #tpu.pipeline_mode<synchronous>, transform_indices = @transform_3, window_bounds = array<i64: 1, 128>}, {pipeline_mode = #tpu.pipeline_mode<synchronous>, transform_indices = @transform_4, window_bounds = array<i64: 128, 128>}]} {
    %c0 = arith.constant 0 : index
    %c0_0 = arith.constant 0 : index
    %0 = vector.load %arg1[%c0, %c0_0] : memref<128x128xf32, #tpu.memory_space<vmem>>, vector<128x128xf32>
    %c0_1 = arith.constant 0 : index
    %c0_2 = arith.constant 0 : index
    %1 = vector.load %arg2[%c0_1, %c0_2] : memref<128x128xf32, #tpu.memory_space<vmem>>, vector<128x128xf32>
    %cst = arith.constant dense<0.000000e+00> : vector<128x128xf32>
    %2 = tpu.matmul %0, %1, %cst {dimension_numbers = #tpu.dot_dimension_numbers<[1], [0], [0], [1], [0, 0, 1, 1], [], []>} : vector<128x128xf32>, vector<128x128xf32>, vector<128x128xf32> -> vector<128x128xf32>
    %c0_3 = arith.constant 0 : index
    %c0_4 = arith.constant 0 : index
    %3 = vector.load %arg3[%c0_3, %c0_4] : memref<128x128xf32, #tpu.memory_space<vmem>>, vector<128x128xf32>
    %cst_5 = arith.constant dense<0.000000e+00> : vector<128x128xf32>
    %4 = tpu.matmul %3, %2, %cst_5 {dimension_numbers = #tpu.dot_dimension_numbers<[1], [0], [0], [1], [0, 0, 1, 1], [], []>} : vector<128x128xf32>, vector<128x128xf32>, vector<128x128xf32> -> vector<128x128xf32>
    %c0_6 = arith.constant 0 : index
    %c0_7 = arith.constant 0 : index
    %5 = vector.load %arg4[%c0_6, %c0_7] : memref<1x128xf32, #tpu.memory_space<vmem>>, vector<1x128xf32>
    %6 = vector.broadcast %5 : vector<1x128xf32> to vector<128x128xf32>
    %7 = arith.addf %4, %6 : vector<128x128xf32>
    %c0_8 = arith.constant 0 : index
    %c0_9 = arith.constant 0 : index
    %8 = vector.load %arg5[%c0_8, %c0_9] : memref<128x128xf32, #tpu.memory_space<vmem>>, vector<128x128xf32>
    tpu.vector_store %arg5[%c0_8, %c0_9], %7 {strides = array<i32>} : memref<128x128xf32, #tpu.memory_space<vmem>>, vector<128x128xf32>,
    return
  }
  func.func @transform_0(%arg0: i32) -> (i32, i32) {
    %c0_i32 = arith.constant 0 : i32
    %c0_i32_0 = arith.constant 0 : i32
    %c0_i32_1 = arith.constant 0 : i32
    return %c0_i32, %c0_i32_0 : i32, i32
  }
  func.func @transform_1(%arg0: i32) -> (i32, i32) {
    %c0_i32 = arith.constant 0 : i32
    %c0_i32_0 = arith.constant 0 : i32
    %c0_i32_1 = arith.constant 0 : i32
    return %c0_i32, %c0_i32_0 : i32, i32
  }
  func.func @transform_2(%arg0: i32) -> (i32, i32) {
    %c0_i32 = arith.constant 0 : i32
    %c0_i32_0 = arith.constant 0 : i32
    %c0_i32_1 = arith.constant 0 : i32
    return %c0_i32, %c0_i32_0 : i32, i32
  }
  func.func @transform_3(%arg0: i32) -> (i32, i32) {
    %c0_i32 = arith.constant 0 : i32
    %c0_i32_0 = arith.constant 0 : i32
    %c0_i32_1 = arith.constant 0 : i32
    return %c0_i32, %c0_i32_0 : i32, i32
  }
  func.func @transform_4(%arg0: i32) -> (i32, i32) {
    %c0_i32 = arith.constant 0 : i32
    %c0_i32_0 = arith.constant 0 : i32
    %c0_i32_1 = arith.constant 0 : i32
    return %c0_i32, %c0_i32_0 : i32, i32
  }
}

</mosaic_0001>

<llo_original>
// kernel: gcn_forward.1
$region0: #{gcn_forward.1}
  #allocation0 [shape = 'u32[]', space=smem, size = 0x4, offset = 0x4, fixed_abs, tag = 'smem constant byte address 0x4 - core index']
  #allocation1 [shape = 'u32[144,128]{1,0:T(1,128)}', space=vmem, size = 0x12000, scoped, tag = 'internal scratch']
  %s0 = inlined_call_operand.vmem [shape: f32[128,128], index: 0, kind: input, shape index: {}]
  %s1 = inlined_call_operand.vmem [shape: f32[128,128], index: 1, kind: input, shape index: {}]
  %s2 = inlined_call_operand.vmem [shape: f32[128,128], index: 2, kind: input, shape index: {}]
  %s3 = inlined_call_operand.vmem [shape: f32[1,128], index: 3, kind: input, shape index: {}]
  %s4 = inlined_call_operand.vmem [shape: f32[128,128], index: 4, kind: output, shape index: {}]
  %s5 = sld [smem:[#allocation0]]
  $region26: #{gcn_forward.1} parent=0
    _
  %s7 = ssub.s32 1, %s5
  %s8 = scalar_select 0, %s7, %s5
  // Predicated region
  $region2: #{gcn_forward.1} parent=0 // pred_check
    _
  $region3: #{gcn_forward.1} parent=0 // pred_check_branch
    %10 = sbr.rel (0) target = $region5
  $region4: #{gcn_forward.1} parent=0 // pred_region
    _
  $region5: #{gcn_forward.1} parent=0 // pred_fallthru
    _
  // Predicated region
  $region6: #{gcn_forward.1} parent=0 // pred_check
    _
  $region7: #{gcn_forward.1} parent=0 // pred_check_branch
    %12 = sbr.rel (0) target = $region9
  $region8: #{gcn_forward.1} parent=0 // pred_region
    _
  $region9: #{gcn_forward.1} parent=0 // pred_fallthru
    _
  // Predicated region
  $region10: #{gcn_forward.1} parent=0 // pred_check
    _
  $region11: #{gcn_forward.1} parent=0 // pred_check_branch
    %14 = sbr.rel (0) target = $region13
  $region12: #{gcn_forward.1} parent=0 // pred_region
    _
  $region13: #{gcn_forward.1} parent=0 // pred_fallthru
    _
  // Predicated region
  $region14: #{gcn_forward.1} parent=0 // pred_check
    _
  $region15: #{gcn_forward.1} parent=0 // pred_check_branch
    %16 = sbr.rel (0) target = $region17
  $region16: #{gcn_forward.1} parent=0 // pred_region
    _
  $region17: #{gcn_forward.1} parent=0 // pred_fallthru
    _
  %v17 = vld [vmem:[%s0] sm:$0xff]
  %v18 = vld [vmem:[%s0 + $0x8] sm:$0xff]
  %v19 = vld [vmem:[%s0 + $0x10] sm:$0xff]
  %v20 = vld [vmem:[%s0 + $0x18] sm:$0xff]
  %v21 = vld [vmem:[%s0 + $0x20] sm:$0xff]
  %v22 = vld [vmem:[%s0 + $0x28] sm:$0xff]
  %v23 = vld [vmem:[%s0 + $0x30] sm:$0xff]
  %v24 = vld [vmem:[%s0 + $0x38] sm:$0xff]
  %v25 = vld [vmem:[%s0 + $0x40] sm:$0xff]
  %v26 = vld [vmem:[%s0 + $0x48] sm:$0xff]
  %v27 = vld [vmem:[%s0 + $0x50] sm:$0xff]
  %v28 = vld [vmem:[%s0 + $0x58] sm:$0xff]
  %v29 = vld [vmem:[%s0 + $0x60] sm:$0xff]
  %v30 = vld [vmem:[%s0 + $0x68] sm:$0xff]
  %v31 = vld [vmem:[%s0 + $0x70] sm:$0xff]
  %v32 = vld [vmem:[%s0 + $0x78] sm:$0xff]
  %v33 = vld [vmem:[%s1] sm:$0xff]
  %v34 = vld [vmem:[%s1 + $0x8] sm:$0xff]
  %v35 = vld [vmem:[%s1 + $0x10] sm:$0xff]
  %v36 = vld [vmem:[%s1 + $0x18] sm:$0xff]
  %v37 = vld [vmem:[%s1 + $0x20] sm:$0xff]
  %v38 = vld [vmem:[%s1 + $0x28] sm:$0xff]
  %v39 = vld [vmem:[%s1 + $0x30] sm:$0xff]
  %v40 = vld [vmem:[%s1 + $0x38] sm:$0xff]
  %v41 = vld [vmem:[%s1 + $0x40] sm:$0xff]
  %v42 = vld [vmem:[%s1 + $0x48] sm:$0xff]
  %v43 = vld [vmem:[%s1 + $0x50] sm:$0xff]
  %v44 = vld [vmem:[%s1 + $0x58] sm:$0xff]
  %v45 = vld [vmem:[%s1 + $0x60] sm:$0xff]
  %v46 = vld [vmem:[%s1 + $0x68] sm:$0xff]
  %v47 = vld [vmem:[%s1 + $0x70] sm:$0xff]
  %v48 = vld [vmem:[%s1 + $0x78] sm:$0xff]
  %49 = vmatprep.subr.mxu0 0.0
  %50 = vmatpush1.msra.mxu0 %v48
  %51 = vmatprep.subr.mxu0 0.0
  %52 = vmatpush1.msra.mxu0 %v47
  %53 = vmatprep.subr.mxu0 0.0
  %54 = vmatpush1.msra.mxu0 %v46
  %55 = vmatprep.subr.mxu0 0.0
  %56 = vmatpush1.msra.mxu0 %v45
  %57 = vmatprep.subr.mxu0 0.0
  %58 = vmatpush1.msra.mxu0 %v44
  %59 = vmatprep.subr.mxu0 0.0
  %60 = vmatpush1.msra.mxu0 %v43
  %61 = vmatprep.subr.mxu0 0.0
  %62 = vmatpush1.msra.mxu0 %v42
  %63 = vmatprep.subr.mxu0 0.0
  %64 = vmatpush1.msra.mxu0 %v41
  %65 = vmatprep.subr.mxu0 0.0
  %66 = vmatpush1.msra.mxu0 %v40
  %67 = vmatprep.subr.mxu0 0.0
  %68 = vmatpush1.msra.mxu0 %v39
  %69 = vmatprep.subr.mxu0 0.0
  %70 = vmatpush1.msra.mxu0 %v38
  %71 = vmatprep.subr.mxu0 0.0
  %72 = vmatpush1.msra.mxu0 %v37
  %73 = vmatprep.subr.mxu0 0.0
  %74 = vmatpush1.msra.mxu0 %v36
  %75 = vmatprep.subr.mxu0 0.0
  %76 = vmatpush1.msra.mxu0 %v35
  %77 = vmatprep.subr.mxu0 0.0
  %78 = vmatpush1.msra.mxu0 %v34
  %79 = vmatprep.subr.mxu0 0.0
  %80 = vmatpush1.msra.mxu0 %v33
  %81 = vmatprep.subr.mxu0 0.0
  %82 = vmatpush2.msra.mxu0 0.0
  %83 = vmatprep.subr.mxu0 0.0
  %84 = vmatpush2.msra.mxu0 0.0
  %85 = vmatprep.subr.mxu0 0.0
  %86 = vmatpush2.msra.mxu0 0.0
  %87 = vmatprep.subr.mxu0 0.0
  %88 = vmatpush2.msra.mxu0 0.0
  %89 = vmatprep.subr.mxu0 0.0
  %90 = vmatpush2.msra.mxu0 0.0
  %91 = vmatprep.subr.mxu0 0.0
  %92 = vmatpush2.msra.mxu0 0.0
  %93 = vmatprep.subr.mxu0 0.0
  %94 = vmatpush2.msra.mxu0 0.0
  %95 = vmatprep.subr.mxu0 0.0
  %96 = vmatpush2.msra.mxu0 0.0
  %97 = vmatprep.subr.mxu0 0.0
  %98 = vmatpush2.msra.mxu0 0.0
  %99 = vmatprep.subr.mxu0 0.0
  %100 = vmatpush2.msra.mxu0 0.0
  %101 = vmatprep.subr.mxu0 0.0
  %102 = vmatpush2.msra.mxu0 0.0
  %103 = vmatprep.subr.mxu0 0.0
  %104 = vmatpush2.msra.mxu0 0.0
  %105 = vmatprep.subr.mxu0 0.0
  %106 = vmatpush2.msra.mxu0 0.0
  %107 = vmatprep.subr.mxu0 0.0
  %108 = vmatpush2.msra.mxu0 0.0
  %109 = vmatprep.subr.mxu0 0.0
  %110 = vmatpush2.msra.mxu0 0.0
  %111 = vmatprep.subr.mxu0 0.0
  %112 = vmatpush2.msra.mxu0 0.0
  %113 = vmatprep.mubr.f32.mxu0 0.0
  %114 = vmatmul.mubr.f32.gmra.mxu0 %v17
  %v115 = vpop.f32.mrf.mxu0
  %v116 = vadd.f32 0.0, %v115
  %v117 = vpop.f32.mrf.mxu0
  %118 = vmatprep.mubr.f32.mxu0 0.0
  %119 = vmatmul.mubr.f32.gmra.mxu0 %v18
  %v120 = vpop.f32.mrf.mxu0
  %v121 = vadd.f32 0.0, %v120
  %v122 = vpop.f32.mrf.mxu0
  %123 = vmatprep.mubr.f32.mxu0 0.0
  %124 = vmatmul.mubr.f32.gmra.mxu0 %v19
  %v125 = vpop.f32.mrf.mxu0
  %v126 = vadd.f32 0.0, %v125
  %v127 = vpop.f32.mrf.mxu0
  %128 = vmatprep.mubr.f32.mxu0 0.0
  %129 = vmatmul.mubr.f32.gmra.mxu0 %v20
  %v130 = vpop.f32.mrf.mxu0
  %v131 = vadd.f32 0.0, %v130
  %v132 = vpop.f32.mrf.mxu0
  %133 = vmatprep.mubr.f32.mxu0 0.0
  %134 = vmatmul.mubr.f32.gmra.mxu0 %v21
  %v135 = vpop.f32.mrf.mxu0
  %v136 = vadd.f32 0.0, %v135
  %v137 = vpop.f32.mrf.mxu0
  %138 = vmatprep.mubr.f32.mxu0 0.0
  %139 = vmatmul.mubr.f32.gmra.mxu0 %v22
  %v140 = vpop.f32.mrf.mxu0
  %v141 = vadd.f32 0.0, %v140
  %v142 = vpop.f32.mrf.mxu0
  %143 = vmatprep.mubr.f32.mxu0 0.0
  %144 = vmatmul.mubr.f32.gmra.mxu0 %v23
  %v145 = vpop.f32.mrf.mxu0
  %v146 = vadd.f32 0.0, %v145
  %v147 = vpop.f32.mrf.mxu0
  %148 = vmatprep.mubr.f32.mxu0 0.0
  %149 = vmatmul.mubr.f32.gmra.mxu0 %v24
  %v150 = vpop.f32.mrf.mxu0
  %v151 = vadd.f32 0.0, %v150
  %v152 = vpop.f32.mrf.mxu0
  %153 = vmatprep.mubr.f32.mxu0 0.0
  %154 = vmatmul.mubr.f32.gmra.mxu0 %v25
  %v155 = vpop.f32.mrf.mxu0
  %v156 = vadd.f32 0.0, %v155
  %v157 = vpop.f32.mrf.mxu0
  %158 = vmatprep.mubr.f32.mxu0 0.0
  %159 = vmatmul.mubr.f32.gmra.mxu0 %v26
  %v160 = vpop.f32.mrf.mxu0
  %v161 = vadd.f32 0.0, %v160
  %v162 = vpop.f32.mrf.mxu0
  %163 = vmatprep.mubr.f32.mxu0 0.0
  %164 = vmatmul.mubr.f32.gmra.mxu0 %v27
  %v165 = vpop.f32.mrf.mxu0
  %v166 = vadd.f32 0.0, %v165
  %v167 = vpop.f32.mrf.mxu0
  %168 = vmatprep.mubr.f32.mxu0 0.0
  %169 = vmatmul.mubr.f32.gmra.mxu0 %v28
  %v170 = vpop.f32.mrf.mxu0
  %v171 = vadd.f32 0.0, %v170
  %v172 = vpop.f32.mrf.mxu0
  %173 = vmatprep.mubr.f32.mxu0 0.0
  %174 = vmatmul.mubr.f32.gmra.mxu0 %v29
  %v175 = vpop.f32.mrf.mxu0
  %v176 = vadd.f32 0.0, %v175
  %v177 = vpop.f32.mrf.mxu0
  %178 = vmatprep.mubr.f32.mxu0 0.0
  %179 = vmatmul.mubr.f32.gmra.mxu0 %v30
  %v180 = vpop.f32.mrf.mxu0
  %v181 = vadd.f32 0.0, %v180
  %v182 = vpop.f32.mrf.mxu0
  %183 = vmatprep.mubr.f32.mxu0 0.0
  %184 = vmatmul.mubr.f32.gmra.mxu0 %v31
  %v185 = vpop.f32.mrf.mxu0
  %v186 = vadd.f32 0.0, %v185
  %v187 = vpop.f32.mrf.mxu0
  %188 = vmatprep.mubr.f32.mxu0 0.0
  %189 = vmatmul.mubr.f32.gmra.mxu0 %v32
  %v190 = vpop.f32.mrf.mxu0
  %v191 = vadd.f32 0.0, %v190
  %v192 = vpop.f32.mrf.mxu0
  %193 = vdwg.mxu0
  %v194 = vld [vmem:[%s2] sm:$0xff]
  %v195 = vld [vmem:[%s2 + $0x8] sm:$0xff]
  %v196 = vld [vmem:[%s2 + $0x10] sm:$0xff]
  %v197 = vld [vmem:[%s2 + $0x18] sm:$0xff]
  %v198 = vld [vmem:[%s2 + $0x20] sm:$0xff]
  %v199 = vld [vmem:[%s2 + $0x28] sm:$0xff]
  %v200 = vld [vmem:[%s2 + $0x30] sm:$0xff]
  %v201 = vld [vmem:[%s2 + $0x38] sm:$0xff]
  %v202 = vld [vmem:[%s2 + $0x40] sm:$0xff]
  %v203 = vld [vmem:[%s2 + $0x48] sm:$0xff]
  %v204 = vld [vmem:[%s2 + $0x50] sm:$0xff]
  %v205 = vld [vmem:[%s2 + $0x58] sm:$0xff]
  %v206 = vld [vmem:[%s2 + $0x60] sm:$0xff]
  %v207 = vld [vmem:[%s2 + $0x68] sm:$0xff]
  %v208 = vld [vmem:[%s2 + $0x70] sm:$0xff]
  %v209 = vld [vmem:[%s2 + $0x78] sm:$0xff]
  %v210 = vld [vmem:[%s3] sm:$0x1]
  %v212 = vlaneseq
  %v213 = vshrl.u32 %v212, 7
  %v214 = vsub.s32 0, %v213
  %v215 = vrot.slane %v210, %v214
  %217 = vmatprep.subr.mxu0 0.0
  %218 = vmatpush1.msra.mxu0 %v191
  %219 = vmatprep.subr.mxu0 0.0
  %220 = vmatpush1.msra.mxu0 %v186
  %221 = vmatprep.subr.mxu0 0.0
  %222 = vmatpush1.msra.mxu0 %v181
  %223 = vmatprep.subr.mxu0 0.0
  %224 = vmatpush1.msra.mxu0 %v176
  %225 = vmatprep.subr.mxu0 0.0
  %226 = vmatpush1.msra.mxu0 %v171
  %227 = vmatprep.subr.mxu0 0.0
  %228 = vmatpush1.msra.mxu0 %v166
  %229 = vmatprep.subr.mxu0 0.0
  %230 = vmatpush1.msra.mxu0 %v161
  %231 = vmatprep.subr.mxu0 0.0
  %232 = vmatpush1.msra.mxu0 %v156
  %233 = vmatprep.subr.mxu0 0.0
  %234 = vmatpush1.msra.mxu0 %v151
  %235 = vmatprep.subr.mxu0 0.0
  %236 = vmatpush1.msra.mxu0 %v146
  %237 = vmatprep.subr.mxu0 0.0
  %238 = vmatpush1.msra.mxu0 %v141
  %239 = vmatprep.subr.mxu0 0.0
  %240 = vmatpush1.msra.mxu0 %v136
  %241 = vmatprep.subr.mxu0 0.0
  %242 = vmatpush1.msra.mxu0 %v131
  %243 = vmatprep.subr.mxu0 0.0
  %244 = vmatpush1.msra.mxu0 %v126
  %245 = vmatprep.subr.mxu0 0.0
  %246 = vmatpush1.msra.mxu0 %v121
  %247 = vmatprep.subr.mxu0 0.0
  %248 = vmatpush1.msra.mxu0 %v116
  %249 = vmatprep.subr.mxu0 0.0
  %250 = vmatpush2.msra.mxu0 0.0
  %251 = vmatprep.subr.mxu0 0.0
  %252 = vmatpush2.msra.mxu0 0.0
  %253 = vmatprep.subr.mxu0 0.0
  %254 = vmatpush2.msra.mxu0 0.0
  %255 = vmatprep.subr.mxu0 0.0
  %256 = vmatpush2.msra.mxu0 0.0
  %257 = vmatprep.subr.mxu0 0.0
  %258 = vmatpush2.msra.mxu0 0.0
  %259 = vmatprep.subr.mxu0 0.0
  %260 = vmatpush2.msra.mxu0 0.0
  %261 = vmatprep.subr.mxu0 0.0
  %262 = vmatpush2.msra.mxu0 0.0
  %263 = vmatprep.subr.mxu0 0.0
  %264 = vmatpush2.msra.mxu0 0.0
  %265 = vmatprep.subr.mxu0 0.0
  %266 = vmatpush2.msra.mxu0 0.0
  %267 = vmatprep.subr.mxu0 0.0
  %268 = vmatpush2.msra.mxu0 0.0
  %269 = vmatprep.subr.mxu0 0.0
  %270 = vmatpush2.msra.mxu0 0.0
  %271 = vmatprep.subr.mxu0 0.0
  %272 = vmatpush2.msra.mxu0 0.0
  %273 = vmatprep.subr.mxu0 0.0
  %274 = vmatpush2.msra.mxu0 0.0
  %275 = vmatprep.subr.mxu0 0.0
  %276 = vmatpush2.msra.mxu0 0.0
  %277 = vmatprep.subr.mxu0 0.0
  %278 = vmatpush2.msra.mxu0 0.0
  %279 = vmatprep.subr.mxu0 0.0
  %280 = vmatpush2.msra.mxu0 0.0
  %281 = vmatprep.mubr.f32.mxu0 0.0
  %282 = vmatmul.mubr.f32.gmra.mxu0 %v194
  %v283 = vpop.f32.mrf.mxu0
  %v284 = vadd.f32 %v215, %v283
  %v285 = vpop.f32.mrf.mxu0
  %286 = vmatprep.mubr.f32.mxu0 0.0
  %287 = vmatmul.mubr.f32.gmra.mxu0 %v195
  %v288 = vpop.f32.mrf.mxu0
  %v289 = vadd.f32 %v215, %v288
  %v290 = vpop.f32.mrf.mxu0
  %291 = vmatprep.mubr.f32.mxu0 0.0
  %292 = vmatmul.mubr.f32.gmra.mxu0 %v196
  %v293 = vpop.f32.mrf.mxu0
  %v294 = vadd.f32 %v215, %v293
  %v295 = vpop.f32.mrf.mxu0
  %296 = vmatprep.mubr.f32.mxu0 0.0
  %297 = vmatmul.mubr.f32.gmra.mxu0 %v197
  %v298 = vpop.f32.mrf.mxu0
  %v299 = vadd.f32 %v215, %v298
  %v300 = vpop.f32.mrf.mxu0
  %301 = vmatprep.mubr.f32.mxu0 0.0
  %302 = vmatmul.mubr.f32.gmra.mxu0 %v198
  %v303 = vpop.f32.mrf.mxu0
  %v304 = vadd.f32 %v215, %v303
  %v305 = vpop.f32.mrf.mxu0
  %306 = vmatprep.mubr.f32.mxu0 0.0
  %307 = vmatmul.mubr.f32.gmra.mxu0 %v199
  %v308 = vpop.f32.mrf.mxu0
  %v309 = vadd.f32 %v215, %v308
  %v310 = vpop.f32.mrf.mxu0
  %311 = vmatprep.mubr.f32.mxu0 0.0
  %312 = vmatmul.mubr.f32.gmra.mxu0 %v200
  %v313 = vpop.f32.mrf.mxu0
  %v314 = vadd.f32 %v215, %v313
  %v315 = vpop.f32.mrf.mxu0
  %316 = vmatprep.mubr.f32.mxu0 0.0
  %317 = vmatmul.mubr.f32.gmra.mxu0 %v201
  %v318 = vpop.f32.mrf.mxu0
  %v319 = vadd.f32 %v215, %v318
  %v320 = vpop.f32.mrf.mxu0
  %321 = vmatprep.mubr.f32.mxu0 0.0
  %322 = vmatmul.mubr.f32.gmra.mxu0 %v202
  %v323 = vpop.f32.mrf.mxu0
  %v324 = vadd.f32 %v215, %v323
  %v325 = vpop.f32.mrf.mxu0
  %326 = vmatprep.mubr.f32.mxu0 0.0
  %327 = vmatmul.mubr.f32.gmra.mxu0 %v203
  %v328 = vpop.f32.mrf.mxu0
  %v329 = vadd.f32 %v215, %v328
  %v330 = vpop.f32.mrf.mxu0
  %331 = vmatprep.mubr.f32.mxu0 0.0
  %332 = vmatmul.mubr.f32.gmra.mxu0 %v204
  %v333 = vpop.f32.mrf.mxu0
  %v334 = vadd.f32 %v215, %v333
  %v335 = vpop.f32.mrf.mxu0
  %336 = vmatprep.mubr.f32.mxu0 0.0
  %337 = vmatmul.mubr.f32.gmra.mxu0 %v205
  %v338 = vpop.f32.mrf.mxu0
  %v339 = vadd.f32 %v215, %v338
  %v340 = vpop.f32.mrf.mxu0
  %341 = vmatprep.mubr.f32.mxu0 0.0
  %342 = vmatmul.mubr.f32.gmra.mxu0 %v206
  %v343 = vpop.f32.mrf.mxu0
  %v344 = vadd.f32 %v215, %v343
  %v345 = vpop.f32.mrf.mxu0
  %346 = vmatprep.mubr.f32.mxu0 0.0
  %347 = vmatmul.mubr.f32.gmra.mxu0 %v207
  %v348 = vpop.f32.mrf.mxu0
  %v349 = vadd.f32 %v215, %v348
  %v350 = vpop.f32.mrf.mxu0
  %351 = vmatprep.mubr.f32.mxu0 0.0
  %352 = vmatmul.mubr.f32.gmra.mxu0 %v208
  %v353 = vpop.f32.mrf.mxu0
  %v354 = vadd.f32 %v215, %v353
  %v355 = vpop.f32.mrf.mxu0
  %356 = vmatprep.mubr.f32.mxu0 0.0
  %357 = vmatmul.mubr.f32.gmra.mxu0 %v209
  %v358 = vpop.f32.mrf.mxu0
  %v359 = vadd.f32 %v215, %v358
  %v360 = vpop.f32.mrf.mxu0
  %361 = vdwg.mxu0
  %362 = vst [vmem:[%s4] sm:$0xff] %v284
  %363 = vst [vmem:[%s4 + $0x8] sm:$0xff] %v289
  %364 = vst [vmem:[%s4 + $0x10] sm:$0xff] %v294
  %365 = vst [vmem:[%s4 + $0x18] sm:$0xff] %v299
  %366 = vst [vmem:[%s4 + $0x20] sm:$0xff] %v304
  %367 = vst [vmem:[%s4 + $0x28] sm:$0xff] %v309
  %368 = vst [vmem:[%s4 + $0x30] sm:$0xff] %v314
  %369 = vst [vmem:[%s4 + $0x38] sm:$0xff] %v319
  %370 = vst [vmem:[%s4 + $0x40] sm:$0xff] %v324
  %371 = vst [vmem:[%s4 + $0x48] sm:$0xff] %v329
  %372 = vst [vmem:[%s4 + $0x50] sm:$0xff] %v334
  %373 = vst [vmem:[%s4 + $0x58] sm:$0xff] %v339
  %374 = vst [vmem:[%s4 + $0x60] sm:$0xff] %v344
  %375 = vst [vmem:[%s4 + $0x68] sm:$0xff] %v349
  %376 = vst [vmem:[%s4 + $0x70] sm:$0xff] %v354
  %377 = vst [vmem:[%s4 + $0x78] sm:$0xff] %v359
  // Predicated region
  $region18: #{gcn_forward.1} parent=0 // pred_check
    _
  $region19: #{gcn_forward.1} parent=0 // pred_check_branch
    %379 = sbr.rel (0) target = $region21
  $region20: #{gcn_forward.1} parent=0 // pred_region
    _
  $region21: #{gcn_forward.1} parent=0 // pred_fallthru
    _
  // Predicated region
  $region22: #{gcn_forward.1} parent=0 // pred_check
    _
  $region23: #{gcn_forward.1} parent=0 // pred_check_branch
    %381 = sbr.rel (0) target = $region25
  $region24: #{gcn_forward.1} parent=0 // pred_region
    _
  $region25: #{gcn_forward.1} parent=0 // pred_fallthru
    _

</llo_original>
